<compile_context>
chip_gen: v6e
topology: v6e:2x2x1
jax: 0.10.0
libtpu: 0.0.40
codegen_flags: <defaults>
</compile_context>

<pallas_src>
import functools

import jax
import jax.numpy as jnp
import numpy as np
from jax.experimental import pallas as pl
from jax.experimental.pallas import tpu as pltpu


def _round_up(x, m):
    return (x + m - 1) // m * m


def sepconv_kernel(xm_ref, xh_ref, wf_ref, pm_ref, o_ref, *, KH, KW, W):
    """One (batch, lane-tile) grid step.

    xm_ref: (Cin_p, LT)        current lane tile of the flattened (C, H*W) input
    xh_ref: (Cin_p, LT)        next lane tile (supplies the (KH-1)*W + KW-1 halo)
    wf_ref: (Cout_p, T*Cin_p)  fused depthwise x pointwise weights, bf16
    pm_ref: (Cout_p, 4)        [fused bias | BN scale | BN shift | pad], f32
    o_ref:  (Cout_p, LT)       lane-dense output tile (LT is a multiple of 128)
    """
    LT = o_ref.shape[-1]

    # Stitch current tile + halo tile: two aligned 128-multiple lane blocks.
    x = jnp.concatenate([xm_ref[...], xh_ref[...]], axis=-1)     # (Cin_p, 2*LT)

    # im2col via contiguous lane-shift slices: tap (kh, kw) contributes the
    # window starting at flat offset kh*W + kw.  Tap-major / channel-minor row
    # order matches wf_ref's column layout.  Built in f32 so every (Cin_p, LT)
    # chunk is an aligned 8-sublane block (Cin_p % 8 == 0), then cast once to
    # bf16 to feed the MXU's fast path.
    # NOTE: if the bundle dump ever shows XLU saturation from these unaligned
    # lane shifts at large Cin*LT, restructure so only the KW offsets are lane
    # rotates (see review); not needed at current sizes.
    taps = []
    for kh in range(KH):
        for kw in range(KW):
            s = kh * W + kw
            taps.append(x[:, s:s + LT])                          # (Cin_p, LT)
    x_cols = jnp.concatenate(taps, axis=0).astype(jnp.bfloat16)  # (T*Cin_p, LT)

    # Single fused MXU matmul (depthwise + pointwise), bf16 x bf16 -> f32 acc.
    y = jnp.dot(wf_ref[...], x_cols,
                preferred_element_type=jnp.float32)              # (Cout_p, LT)

    # Fused bias (must precede ReLU), ReLU, folded eval-mode BatchNorm affine.
    p = pm_ref[...]
    bias, scale, shift = p[:, 0:1], p[:, 1:2], p[:, 2:3]
    y = jnp.maximum(y + bias, 0.0) * scale + shift

    o_ref[...] = y.astype(o_ref.dtype)


def sepconv_forward(x_nchw, wf_flat, params, *, out_channels, kernel_size,
                    lane_tile=128, crop=True):
    """Pad/flatten the input, run the Pallas kernel over (batch, lane-tile).

    wf_flat: (Cout_p, KH*KW*Cin_p) bf16 fused weights (see fuse_sepconv_params)
    params:  (Cout_p, 4) f32 [fused bias, BN scale, BN shift, 0]
    lane_tile: per-step output lane width; must be a multiple of 128 and at
        least (KH-1)*W + KW - 1.  Larger multiples (256/512) amortize per-step
        overhead on single-TC v5e/v6e; 128 keeps tiles small for v7x VMEM.
    """
    KH, KW = kernel_size
    N, Cin, H, W = x_nchw.shape
    T = KH * KW
    Cout_p, K = wf_flat.shape
    Cin_p = K // T
    Ho, Wo = H - KH + 1, W - KW + 1

    halo = (KH - 1) * W + (KW - 1)
    LT = lane_tile
    assert LT % 128 == 0, "lane_tile must be a multiple of 128"
    assert halo <= LT, "lane_tile must cover the (KH-1)*W + KW-1 halo"
    nrt = (Ho * W + LT - 1) // LT            # number of output lane tiles
    Lin_pad = (nrt + 1) * LT                 # one extra tile = halo source
    assert Lin_pad >= H * W + KW - 1

    # Contiguous reshape + zero-pad: channels up to a sublane multiple of 8,
    # lanes up to (nrt+1)*LT so the halo block index (r+1) is always in range.
    x_flat = x_nchw.reshape(N, Cin, H * W)
    x_pad = jnp.pad(x_flat, ((0, 0), (0, Cin_p - Cin), (0, Lin_pad - H * W)))

    kern = functools.partial(sepconv_kernel, KH=KH, KW=KW, W=W)

    # NOTE: wf/params blocks are grid-invariant; pl.Buffered(1) would halve
    # their (tiny) VMEM footprint — skipped here, negligible at this size.
    out = pl.pallas_call(
        kern,
        out_shape=jax.ShapeDtypeStruct((N, Cout_p, nrt * LT), x_nchw.dtype),
        grid=(N, nrt),
        in_specs=[
            # current lane tile
            pl.BlockSpec((pl.Squeezed(), Cin_p, LT), lambda n, r: (n, 0, r)),
            # next lane tile (halo) -- same array, shifted block index
            pl.BlockSpec((pl.Squeezed(), Cin_p, LT), lambda n, r: (n, 0, r + 1)),
            # fused weights (resident)
            pl.BlockSpec((Cout_p, T * Cin_p), lambda n, r: (0, 0)),
            # merged bias/scale/shift (resident)
            pl.BlockSpec((Cout_p, 4), lambda n, r: (0, 0)),
        ],
        out_specs=pl.BlockSpec((pl.Squeezed(), Cout_p, LT),
                               lambda n, r: (n, 0, r)),
        compiler_params=pltpu.CompilerParams(
            dimension_semantics=("parallel", "parallel"),
            vmem_limit_bytes=32 * 1024 * 1024),
    )(x_pad, x_pad, wf_flat, params)

    if not crop:
        # Lane-dense padded slab (N, Cout_p, nrt*LT); valid data is
        # [:, :out_channels, :Ho*W] viewed as (Ho, W) rows with the last
        # KW-1 columns of each row garbage.  Lets downstream fuse the crop.
        return out

    out = out[:, :out_channels, :Ho * W].reshape(N, out_channels, Ho, W)
    return out[:, :, :, :Wo]


def fuse_sepconv_params(w_dw, b_dw, w_pw, gamma, beta, rmean, rvar, eps,
                        in_channels, depth_multiplier, kernel_size):
    """One-off glue: fold pointwise into depthwise taps, pad channels, fold BN.

    Returns:
      wf_flat: (Cout_p, T*Cin_p) bf16, column index = t*Cin_p + ci
      params:  (Cout_p, 4) f32, columns [fused bias, BN scale, BN shift, 0]
    """
    KH, KW = kernel_size
    T = KH * KW
    Cin, dm = in_channels, depth_multiplier
    Cout = w_pw.shape[0]
    Cin_p = _round_up(Cin, 8)
    Cout_p = _round_up(Cout, 8)

    # Depthwise output channel cm = ci*dm + m reads input channel ci.
    #   W_fused[co, t, ci] = sum_m w_pw[co, ci*dm+m] * w_dw[ci*dm+m, t]
    w_dw_r = w_dw.reshape(Cin, dm, T)                   # [ci, m, t]
    w_pw_r = w_pw[:, :, 0, 0].reshape(Cout, Cin, dm)    # [co, ci, m]
    wf = jnp.einsum('ocd,cdt->otc', w_pw_r, w_dw_r)     # (Cout, T, Cin)
    wf = jnp.pad(wf, ((0, Cout_p - Cout), (0, 0), (0, Cin_p - Cin)))
    wf_flat = wf.reshape(Cout_p, T * Cin_p).astype(jnp.bfloat16)

    bf = w_pw[:, :, 0, 0] @ b_dw                        # fused bias (pre-ReLU)
    inv = gamma / jnp.sqrt(rvar + eps)                  # eval-mode BN fold
    scale = inv
    shift = beta - rmean * inv
    params = jnp.stack([bf, scale, shift, jnp.zeros_like(bf)], axis=1)
    params = jnp.pad(params, ((0, Cout_p - Cout), (0, 0))).astype(jnp.float32)
    return wf_flat, params


def reference_forward(x_nchw, w_dw, b_dw, w_pw, gamma, beta, rmean, rvar, eps,
                      in_channels):
    """Pure-JAX reference (lax conv) for correctness checking."""
    mid = jax.lax.conv_general_dilated(
        x_nchw, w_dw, window_strides=(1, 1), padding="VALID",
        dimension_numbers=("NCHW", "OIHW", "NCHW"),
        feature_group_count=in_channels)
    mid = mid + b_dw[None, :, None, None]
    y = jax.lax.conv_general_dilated(
        mid, w_pw, window_strides=(1, 1), padding="VALID",
        dimension_numbers=("NCHW", "OIHW", "NCHW"))
    y = jnp.maximum(y, 0.0)
    inv = gamma / jnp.sqrt(rvar + eps)
    y = (y - rmean[None, :, None, None]) * inv[None, :, None, None] \
        + beta[None, :, None, None]
    return y


if __name__ == "__main__":
    # Module hyper-parameters (small, consistent with SepConv usage).
    N, Cin, H, W = 2, 4, 16, 16
    KH, KW = 3, 3
    dm = 2
    Cmid = Cin * dm
    Cout = 8
    eps = 1e-5

    key = jax.random.PRNGKey(0)
    ks = jax.random.split(key, 8)

    # PyTorch-shaped parameters (deterministic synthetic init).
    x_nchw = jax.random.normal(ks[0], (N, Cin, H, W), jnp.float32)
    w_dw = jax.random.normal(ks[1], (Cmid, 1, KH, KW), jnp.float32) * 0.2
    b_dw = jax.random.normal(ks[2], (Cmid,), jnp.float32) * 0.1
    w_pw = jax.random.normal(ks[3], (Cout, Cmid, 1, 1), jnp.float32) * 0.2
    gamma = 1.0 + 0.1 * jax.random.normal(ks[4], (Cout,), jnp.float32)
    beta = 0.1 * jax.random.normal(ks[5], (Cout,), jnp.float32)
    rmean = 0.1 * jax.random.normal(ks[6], (Cout,), jnp.float32)
    rvar = jax.random.uniform(ks[7], (Cout,), jnp.float32, 0.5, 1.5)

    wf_flat, params = fuse_sepconv_params(
        w_dw, b_dw, w_pw, gamma, beta, rmean, rvar, eps,
        in_channels=Cin, depth_multiplier=dm, kernel_size=(KH, KW))

    fwd = jax.jit(functools.partial(
        sepconv_forward, out_channels=Cout, kernel_size=(KH, KW),
        lane_tile=128))
    out = fwd(x_nchw, wf_flat, params)
    out = jax.block_until_ready(out)

    ref = reference_forward(x_nchw, w_dw, b_dw, w_pw, gamma, beta, rmean, rvar,
                            eps, Cin)
    ref = jax.block_until_ready(ref)

    assert out.shape == (N, Cout, H - KH + 1, W - KW + 1), out.shape
    # bf16 MXU operands (f32 accumulate) -> tolerance loosened vs the f32 path.
    np.testing.assert_allclose(np.asarray(out), np.asarray(ref),
                               rtol=2e-2, atol=2e-2)
    print("KERNEL_OK")
</pallas_src>

<mosaic_0001>
module attributes {stable_mosaic.version = 11 : i64} {
  func.func @sepconv_kernel(%arg0: i32, %arg1: i32, %arg2: memref<1x8x128xf32, #tpu.memory_space<vmem>>, %arg3: memref<1x8x128xf32, #tpu.memory_space<vmem>>, %arg4: memref<8x72xbf16, #tpu.memory_space<vmem>>, %arg5: memref<8x4xf32, #tpu.memory_space<vmem>>, %arg6: memref<1x8x128xf32, #tpu.memory_space<vmem>>) attributes {dimension_semantics = [#tpu.dimension_semantics<parallel>, #tpu.dimension_semantics<parallel>], iteration_bounds = array<i64: 2, 2>, scalar_prefetch = 0 : i64, scratch_operands = 0 : i64, tpu.core_type = #tpu.core_type<tc>, window_params = [{transform_indices = @transform_0, window_bounds = array<i64: 1, 8, 128>}, {transform_indices = @transform_1, window_bounds = array<i64: 1, 8, 128>}, {pipeline_mode = #tpu.pipeline_mode<synchronous>, transform_indices = @transform_2, window_bounds = array<i64: 8, 72>}, {pipeline_mode = #tpu.pipeline_mode<synchronous>, transform_indices = @transform_3, window_bounds = array<i64: 8, 4>}, {transform_indices = @transform_4, window_bounds = array<i64: 1, 8, 128>}]} {
    %c0 = arith.constant 0 : index
    %c0_0 = arith.constant 0 : index
    %c0_1 = arith.constant 0 : index
    %0 = vector.load %arg2[%c0, %c0_0, %c0_1] : memref<1x8x128xf32, #tpu.memory_space<vmem>>, vector<1x8x128xf32>
    %1 = vector.shape_cast %0 : vector<1x8x128xf32> to vector<8x128xf32>
    %c0_2 = arith.constant 0 : index
    %c0_3 = arith.constant 0 : index
    %c0_4 = arith.constant 0 : index
    %2 = vector.load %arg3[%c0_2, %c0_3, %c0_4] : memref<1x8x128xf32, #tpu.memory_space<vmem>>, vector<1x8x128xf32>
    %3 = vector.shape_cast %2 : vector<1x8x128xf32> to vector<8x128xf32>
    %4 = tpu.concatenate %1, %3 in 1 : vector<8x128xf32>, vector<8x128xf32> -> vector<8x256xf32>
    %5 = vector.extract_strided_slice %4 {offsets = [0, 0], sizes = [8, 128], strides = [1, 1]} : vector<8x256xf32> to vector<8x128xf32>
    %6 = vector.extract_strided_slice %4 {offsets = [0, 1], sizes = [8, 128], strides = [1, 1]} : vector<8x256xf32> to vector<8x128xf32>
    %7 = vector.extract_strided_slice %4 {offsets = [0, 2], sizes = [8, 128], strides = [1, 1]} : vector<8x256xf32> to vector<8x128xf32>
    %8 = vector.extract_strided_slice %4 {offsets = [0, 16], sizes = [8, 128], strides = [1, 1]} : vector<8x256xf32> to vector<8x128xf32>
    %9 = vector.extract_strided_slice %4 {offsets = [0, 17], sizes = [8, 128], strides = [1, 1]} : vector<8x256xf32> to vector<8x128xf32>
    %10 = vector.extract_strided_slice %4 {offsets = [0, 18], sizes = [8, 128], strides = [1, 1]} : vector<8x256xf32> to vector<8x128xf32>
    %11 = vector.extract_strided_slice %4 {offsets = [0, 32], sizes = [8, 128], strides = [1, 1]} : vector<8x256xf32> to vector<8x128xf32>
    %12 = vector.extract_strided_slice %4 {offsets = [0, 33], sizes = [8, 128], strides = [1, 1]} : vector<8x256xf32> to vector<8x128xf32>
    %13 = vector.extract_strided_slice %4 {offsets = [0, 34], sizes = [8, 128], strides = [1, 1]} : vector<8x256xf32> to vector<8x128xf32>
    %14 = tpu.concatenate %5, %6, %7, %8, %9, %10, %11, %12, %13 in 0 : vector<8x128xf32>, vector<8x128xf32>, vector<8x128xf32>, vector<8x128xf32>, vector<8x128xf32>, vector<8x128xf32>, vector<8x128xf32>, vector<8x128xf32>, vector<8x128xf32> -> vector<72x128xf32>
    %15 = arith.truncf %14 : vector<72x128xf32> to vector<72x128xbf16>
    %c0_5 = arith.constant 0 : index
    %c0_6 = arith.constant 0 : index
    %16 = vector.load %arg4[%c0_5, %c0_6] : memref<8x72xbf16, #tpu.memory_space<vmem>>, vector<8x72xbf16>
    %cst = arith.constant dense<0.000000e+00> : vector<8x128xf32>
    %17 = tpu.matmul %16, %15, %cst {dimension_numbers = #tpu.dot_dimension_numbers<[1], [0], [0], [1], [0, 0, 1, 1], [], []>} : vector<8x72xbf16>, vector<72x128xbf16>, vector<8x128xf32> -> vector<8x128xf32>
    %c0_7 = arith.constant 0 : index
    %c0_8 = arith.constant 0 : index
    %18 = vector.load %arg5[%c0_7, %c0_8] : memref<8x4xf32, #tpu.memory_space<vmem>>, vector<8x4xf32>
    %19 = vector.extract_strided_slice %18 {offsets = [0, 0], sizes = [8, 1], strides = [1, 1]} : vector<8x4xf32> to vector<8x1xf32>
    %20 = vector.extract_strided_slice %18 {offsets = [0, 1], sizes = [8, 1], strides = [1, 1]} : vector<8x4xf32> to vector<8x1xf32>
    %21 = vector.extract_strided_slice %18 {offsets = [0, 2], sizes = [8, 1], strides = [1, 1]} : vector<8x4xf32> to vector<8x1xf32>
    %22 = vector.broadcast %19 : vector<8x1xf32> to vector<8x128xf32>
    %23 = arith.addf %17, %22 : vector<8x128xf32>
    %cst_9 = arith.constant 0.000000e+00 : f32
    %24 = vector.broadcast %cst_9 : f32 to vector<8x128xf32>
    %25 = arith.maximumf %23, %24 : vector<8x128xf32>
    %26 = vector.broadcast %20 : vector<8x1xf32> to vector<8x128xf32>
    %27 = arith.mulf %25, %26 : vector<8x128xf32>
    %28 = vector.broadcast %21 : vector<8x1xf32> to vector<8x128xf32>
    %29 = arith.addf %27, %28 : vector<8x128xf32>
    %c0_10 = arith.constant 0 : index
    %c0_11 = arith.constant 0 : index
    %c0_12 = arith.constant 0 : index
    %30 = vector.load %arg6[%c0_10, %c0_11, %c0_12] : memref<1x8x128xf32, #tpu.memory_space<vmem>>, vector<1x8x128xf32>
    %31 = vector.shape_cast %30 : vector<1x8x128xf32> to vector<8x128xf32>
    %32 = vector.shape_cast %29 : vector<8x128xf32> to vector<1x8x128xf32>
    tpu.vector_store %arg6[%c0_10, %c0_11, %c0_12], %32 {strides = array<i32>} : memref<1x8x128xf32, #tpu.memory_space<vmem>>, vector<1x8x128xf32>,
    return
  }
  func.func @transform_0(%arg0: i32, %arg1: i32) -> (i32, i32, i32) {
    %c0_i32 = arith.constant 0 : i32
    %c0_i32_0 = arith.constant 0 : i32
    return %arg0, %c0_i32, %arg1 : i32, i32, i32
  }
  func.func @transform_1(%arg0: i32, %arg1: i32) -> (i32, i32, i32) {
    %c1_i32 = arith.constant 1 : i32
    %0 = arith.addi %arg1, %c1_i32 : i32
    %c0_i32 = arith.constant 0 : i32
    %c0_i32_0 = arith.constant 0 : i32
    return %arg0, %c0_i32, %0 : i32, i32, i32
  }
  func.func @transform_2(%arg0: i32, %arg1: i32) -> (i32, i32) {
    %c0_i32 = arith.constant 0 : i32
    %c0_i32_0 = arith.constant 0 : i32
    %c0_i32_1 = arith.constant 0 : i32
    return %c0_i32, %c0_i32_0 : i32, i32
  }
  func.func @transform_3(%arg0: i32, %arg1: i32) -> (i32, i32) {
    %c0_i32 = arith.constant 0 : i32
    %c0_i32_0 = arith.constant 0 : i32
    %c0_i32_1 = arith.constant 0 : i32
    return %c0_i32, %c0_i32_0 : i32, i32
  }
  func.func @transform_4(%arg0: i32, %arg1: i32) -> (i32, i32, i32) {
    %c0_i32 = arith.constant 0 : i32
    %c0_i32_0 = arith.constant 0 : i32
    return %arg0, %c0_i32, %arg1 : i32, i32, i32
  }
}

</mosaic_0001>

<llo_original>
// kernel: sepconv_forward.1
$region0: #{sepconv_forward.1}
  #allocation0 [shape = 'u32[]', space=smem, size = 0x4, offset = 0x4, fixed_abs, tag = 'smem constant byte address 0x4 - core index']
  #allocation1 [shape = 'u32[144,128]{1,0:T(1,128)}', space=vmem, size = 0x12000, scoped, tag = 'internal scratch']
  %s0 = inlined_call_operand.vmem [shape: f32[2,8,384], index: 0, kind: input, shape index: {}, may-alias: {0,1}]
  %s1 = inlined_call_operand.vmem [shape: f32[2,8,384], index: 1, kind: input, shape index: {}, may-alias: {0,1}]
  %s2 = inlined_call_operand.vmem [shape: bf16[8,72], index: 2, kind: input, shape index: {}]
  %s3 = inlined_call_operand.vmem [shape: f32[8,4], index: 3, kind: input, shape index: {}]
  %s4 = inlined_call_operand.vmem [shape: f32[2,8,256], index: 4, kind: output, shape index: {}]
  %s5 = sld [smem:[#allocation0]]
  $region49: #{sepconv_forward.1} parent=0
    _
  %s7 = ssub.s32 1, %s5
  %s8 = scalar_select 0, %s7, %s5
  loop: start=0, step=1, limit=6
  $region2: #{sepconv_forward.1} parent=0 // loop_pre_header
    _
  $region3: #{sepconv_forward.1} parent=0 // loop_header
    %s10 = sphi 0, %s14
    %p11 = scmp.ge.s32.totalorder %s10, 6
    %s17 = sphi 0, %s29
    %s18 = sphi 0, %s25
    %s19 = sphi 0, %s17
    %s20 = sphi 0, %s18
    %s21 = sphi 0, %s19
    %s22 = sphi 0, %s20
    %s34 = sphi 0, %s36
    %s37 = sphi 0, %s34
    %s38 = sphi 0, %s37
    %s54 = sphi 0, %s38
    %s64 = sphi 0, %s66
    %s67 = sphi 0, %s64
    %s68 = sphi 0, %s67
    %s84 = sphi 0, %s68
    %s88 = sphi 0, %s88
    %s90 = sphi 0, %s88
    %s91 = sphi 0, %s90
    %s105 = sphi 0, %s91
    %s109 = sphi 0, %s109
    %s111 = sphi 0, %s109
    %s112 = sphi 0, %s111
    %s126 = sphi 0, %s112
    %s134 = sphi 0, %s136
    %s137 = sphi 0, %s134
    %s138 = sphi 0, %s137
    %s154 = sphi 0, %s138
  $region4: #{sepconv_forward.1} parent=0 // loop_header_branch
    %13 = sbr.rel (%p11) target = $region8
  $region5: #{sepconv_forward.1} parent=0 // loop_body
    %s15 = ssub.s32 %s10, 1
    %s16 = ssub.s32 %s10, 2
    %s23 = sadd.s32 1, %s18
    %p24 = scmp.ge.s32.totalorder %s23, 2
    %s25 = scalar_select %p24, 0, %s23
    %s26 = sadd.s32 1, %s17
    %s27 = scalar_select %p24, %s26, %s17
    %p28 = scmp.ge.s32.totalorder %s27, 2
    %s29 = scalar_select %p28, 0, %s27
    %s30 = ssub.s32 %s17, %s29
    %s31 = ssub.s32 %s18, %s25
    %s32 = sor.u32 %s30, %s31
    %p33 = scmp.eq.s32.totalorder %s32, 0
    %s35 = sadd.s32 %s34, 1
    %s36 = scalar_select %p33, %s34, %s35
    %p39 = pneg %p33
    %p40 = scmp.eq.s32.totalorder %s10, 3
    %p41 = por %p39, %p40
    %p42 = scmp.ne.s32.totalorder %s34, %s37
    %p43 = scmp.eq.s32.totalorder %s10, 0
    %p44 = por %p42, %p43
    %p45 = scmp.ne.s32.totalorder %s34, %s37
    %p46 = scmp.eq.s32.totalorder %s15, 3
    %p47 = por %p45, %p46
    %p48 = scmp.ne.s32.totalorder %s37, %s38
    %p49 = scmp.eq.s32.totalorder %s15, 0
    %p50 = por %p48, %p49
    %p51 = scmp.ne.s32.totalorder %s37, %s38
    %p52 = scmp.eq.s32.totalorder %s16, 3
    %p53 = por %p51, %p52
    %p55 = scmp.ne.s32.totalorder %s38, %s54
    %p56 = scmp.eq.s32.totalorder %s16, 0
    %p57 = por %p55, %p56
    %s58 = sadd.s32 %s18, 1
    %s59 = sadd.s32 %s25, 1
    %s60 = ssub.s32 %s17, %s29
    %s61 = ssub.s32 %s58, %s59
    %s62 = sor.u32 %s60, %s61
    %p63 = scmp.eq.s32.totalorder %s62, 0
    %s65 = sadd.s32 %s64, 1
    %s66 = scalar_select %p63, %s64, %s65
    %p69 = pneg %p63
    %p70 = scmp.eq.s32.totalorder %s10, 3
    %p71 = por %p69, %p70
    %p72 = scmp.ne.s32.totalorder %s64, %s67
    %p73 = scmp.eq.s32.totalorder %s10, 0
    %p74 = por %p72, %p73
    %p75 = scmp.ne.s32.totalorder %s64, %s67
    %p76 = scmp.eq.s32.totalorder %s15, 3
    %p77 = por %p75, %p76
    %p78 = scmp.ne.s32.totalorder %s67, %s68
    %p79 = scmp.eq.s32.totalorder %s15, 0
    %p80 = por %p78, %p79
    %p81 = scmp.ne.s32.totalorder %s67, %s68
    %p82 = scmp.eq.s32.totalorder %s16, 3
    %p83 = por %p81, %p82
    %p85 = scmp.ne.s32.totalorder %s68, %s84
    %p86 = scmp.eq.s32.totalorder %s16, 0
    %p87 = por %p85, %p86
    %s89 = sadd.s32 %s88, 1
    %p92 = scmp.eq.s32.totalorder %s10, 3
    %p93 = scmp.ne.s32.totalorder %s88, %s90
    %p94 = scmp.eq.s32.totalorder %s10, 0
    %p95 = por %p93, %p94
    %p96 = scmp.ne.s32.totalorder %s88, %s90
    %p97 = scmp.eq.s32.totalorder %s15, 3
    %p98 = por %p96, %p97
    %p99 = scmp.ne.s32.totalorder %s90, %s91
    %p100 = scmp.eq.s32.totalorder %s15, 0
    %p101 = por %p99, %p100
    %p102 = scmp.ne.s32.totalorder %s90, %s91
    %p103 = scmp.eq.s32.totalorder %s16, 3
    %p104 = por %p102, %p103
    %p106 = scmp.ne.s32.totalorder %s91, %s105
    %p107 = scmp.eq.s32.totalorder %s16, 0
    %p108 = por %p106, %p107
    %s110 = sadd.s32 %s109, 1
    %p113 = scmp.eq.s32.totalorder %s10, 3
    %p114 = scmp.ne.s32.totalorder %s109, %s111
    %p115 = scmp.eq.s32.totalorder %s10, 0
    %p116 = por %p114, %p115
    %p117 = scmp.ne.s32.totalorder %s109, %s111
    %p118 = scmp.eq.s32.totalorder %s15, 3
    %p119 = por %p117, %p118
    %p120 = scmp.ne.s32.totalorder %s111, %s112
    %p121 = scmp.eq.s32.totalorder %s15, 0
    %p122 = por %p120, %p121
    %p123 = scmp.ne.s32.totalorder %s111, %s112
    %p124 = scmp.eq.s32.totalorder %s16, 3
    %p125 = por %p123, %p124
    %p127 = scmp.ne.s32.totalorder %s112, %s126
    %p128 = scmp.eq.s32.totalorder %s16, 0
    %p129 = por %p127, %p128
    %s130 = ssub.s32 %s17, %s29
    %s131 = ssub.s32 %s18, %s25
    %s132 = sor.u32 %s130, %s131
    %p133 = scmp.eq.s32.totalorder %s132, 0
    %s135 = sadd.s32 %s134, 1
    %s136 = scalar_select %p133, %s134, %s135
    %p139 = pneg %p133
    %p140 = scmp.eq.s32.totalorder %s10, 3
    %p141 = por %p139, %p140
    %p142 = scmp.ne.s32.totalorder %s134, %s137
    %p143 = scmp.eq.s32.totalorder %s10, 0
    %p144 = por %p142, %p143
    %p145 = scmp.ne.s32.totalorder %s134, %s137
    %p146 = scmp.eq.s32.totalorder %s15, 3
    %p147 = por %p145, %p146
    %p148 = scmp.ne.s32.totalorder %s137, %s138
    %p149 = scmp.eq.s32.totalorder %s15, 0
    %p150 = por %p148, %p149
    %p151 = scmp.ne.s32.totalorder %s137, %s138
    %p152 = scmp.eq.s32.totalorder %s16, 3
    %p153 = por %p151, %p152
    %p155 = scmp.ne.s32.totalorder %s138, %s154
    %p156 = scmp.eq.s32.totalorder %s16, 0
    %p157 = por %p155, %p156
    %p158 = scmp.le.s32.totalorder 1, %s10
    %p159 = scmp.lt.s32.totalorder %s10, 5
    %p160 = pnand %p158, %p159
    %p161 = pneg %p160
    // Predicated region
    $region9: #{sepconv_forward.1} parent=5 // pred_check
      _
    $region10: #{sepconv_forward.1} parent=5 // pred_check_branch
      %163 = sbr.rel (%p160) target = $region12
    $region11: #{sepconv_forward.1} parent=5 // pred_region
      %s164 = ssub.s32 %s10, 1
      // Predicated region
      $region13: #{sepconv_forward.1} parent=11 // pred_check
        %p165 = pneg %p101
      $region14: #{sepconv_forward.1} parent=11 // pred_check_branch
        %167 = sbr.rel (%p165) target = $region16
      $region15: #{sepconv_forward.1} parent=11 // pred_region
        _
      $region16: #{sepconv_forward.1} parent=11 // pred_fallthru
        _
      // Predicated region
      $region17: #{sepconv_forward.1} parent=11 // pred_check
        %p168 = pneg %p122
      $region18: #{sepconv_forward.1} parent=11 // pred_check_branch
        %170 = sbr.rel (%p168) target = $region20
      $region19: #{sepconv_forward.1} parent=11 // pred_region
        _
      $region20: #{sepconv_forward.1} parent=11 // pred_fallthru
        _
    $region12: #{sepconv_forward.1} parent=5 // pred_fallthru
      _
    %p171 = scmp.lt.s32.totalorder %s10, 4
    // Predicated region
    $region21: #{sepconv_forward.1} parent=5 // pred_check
      %p172 = pneg %p171
    $region22: #{sepconv_forward.1} parent=5 // pred_check_branch
      %174 = sbr.rel (%p172) target = $region24
    $region23: #{sepconv_forward.1} parent=5 // pred_region
      // Predicated region
      $region25: #{sepconv_forward.1} parent=23 // pred_check
        %p175 = pneg %p44
      $region26: #{sepconv_forward.1} parent=23 // pred_check_branch
        %177 = sbr.rel (%p175) target = $region28
      $region27: #{sepconv_forward.1} parent=23 // pred_region
        %p178 = scmp.lt.s32.totalorder %s17, 1
        %s179 = scalar_select %p178, %s17, 1
        %p180 = scmp.lt.s32.totalorder %s18, 2
        %s181 = scalar_select %p180, %s18, 2
        %s182 = smul.addr %s179, 3
        %s183 = sadd.s32 %s181, %s182
        %s184 = smul.addr %s183, 8
        %s185 = scalar_lea.vmem %s0, %s184
      $region28: #{sepconv_forward.1} parent=23 // pred_fallthru
        _
      // Predicated region
      $region29: #{sepconv_forward.1} parent=23 // pred_check
        %p186 = pneg %p74
      $region30: #{sepconv_forward.1} parent=23 // pred_check_branch
        %188 = sbr.rel (%p186) target = $region32
      $region31: #{sepconv_forward.1} parent=23 // pred_region
        %s189 = sadd.s32 %s18, 1
        %p190 = scmp.lt.s32.totalorder %s17, 1
        %s191 = scalar_select %p190, %s17, 1
        %p192 = scmp.lt.s32.totalorder %s189, 2
        %s193 = scalar_select %p192, %s189, 2
        %s194 = smul.addr %s191, 3
        %s195 = sadd.s32 %s193, %s194
        %s196 = smul.addr %s195, 8
        %s197 = scalar_lea.vmem %s1, %s196
        %s198 = sadd.s32 %s18, 1
      $region32: #{sepconv_forward.1} parent=23 // pred_fallthru
        _
    $region24: #{sepconv_forward.1} parent=5 // pred_fallthru
      _
    %p199 = scmp.le.s32.totalorder 1, %s10
    %p200 = scmp.lt.s32.totalorder %s10, 5
    %p201 = pnand %p199, %p200
    %p202 = pneg %p201
    // Predicated region
    $region33: #{sepconv_forward.1} parent=5 // pred_check
      _
    $region34: #{sepconv_forward.1} parent=5 // pred_check_branch
      %204 = sbr.rel (%p201) target = $region36
    $region35: #{sepconv_forward.1} parent=5 // pred_region
      %s205 = ssub.s32 %s10, 1
      %p206 = scmp.lt.s32.totalorder %s19, 1
      %s207 = scalar_select %p206, %s19, 1
      %p208 = scmp.lt.s32.totalorder %s20, 2
      %s209 = scalar_select %p208, %s20, 2
      %s210 = smul.addr %s207, 3
      %s211 = sadd.s32 %s209, %s210
      %s212 = smul.addr %s211, 8
      %s213 = scalar_lea.vmem %s0, %s212
      %p214 = pneg %p50
      %p215 = pneg %p47
      %s216 = sadd.s32 %s20, 1
      %p217 = scmp.lt.s32.totalorder %s19, 1
      %s218 = scalar_select %p217, %s19, 1
      %p219 = scmp.lt.s32.totalorder %s216, 2
      %s220 = scalar_select %p219, %s216, 2
      %s221 = smul.addr %s218, 3
      %s222 = sadd.s32 %s220, %s221
      %s223 = smul.addr %s222, 8
      %s224 = scalar_lea.vmem %s1, %s223
      %p225 = pneg %p80
      %p226 = pneg %p77
      %p227 = pneg %p101
      %p228 = pneg %p98
      %p229 = pneg %p122
      %p230 = pneg %p119
      %p231 = pneg %p150
      %p232 = pneg %p147
      %p233 = scmp.lt.s32.totalorder %s19, 1
      %s234 = scalar_select %p233, %s19, 1
      %p235 = scmp.lt.s32.totalorder %s20, 1
      %s236 = scalar_select %p235, %s20, 1
      %s237 = smul.addr %s234, 2
      %s238 = sadd.s32 %s236, %s237
      %s239 = smul.addr %s238, 8
      %s240 = scalar_lea.vmem %s4, %s239
      %p241 = scmp.lt.s32.totalorder %s19, 1
      %s242 = scalar_select %p241, %s19, 1
      %p243 = scmp.lt.s32.totalorder %s20, 2
      %s244 = scalar_select %p243, %s20, 2
      %s245 = smul.addr %s242, 3
      %s246 = sadd.s32 %s244, %s245
      %s247 = smul.addr %s246, 8
      %s248 = scalar_lea.vmem %s0, %s247
      %s249 = sadd.s32 %s20, 1
      %p250 = scmp.lt.s32.totalorder %s19, 1
      %s251 = scalar_select %p250, %s19, 1
      %p252 = scmp.lt.s32.totalorder %s249, 2
      %s253 = scalar_select %p252, %s249, 2
      %s254 = smul.addr %s251, 3
      %s255 = sadd.s32 %s253, %s254
      %s256 = smul.addr %s255, 8
      %s257 = scalar_lea.vmem %s1, %s256
      %s258 = sadd.s32 %s20, 1
      %p259 = scmp.lt.s32.totalorder %s19, 1
      %s260 = scalar_select %p259, %s19, 1
      %p261 = scmp.lt.s32.totalorder %s20, 1
      %s262 = scalar_select %p261, %s20, 1
      %s263 = smul.addr %s260, 2
      %s264 = sadd.s32 %s262, %s263
      %s265 = smul.addr %s264, 8
      %s266 = scalar_lea.vmem %s4, %s265
      %v268 = vld [vmem:[%s248] sm:$0xff]
      %v269 = vld [vmem:[%s257] sm:$0xff]
      %272 = vrot.lane.b32.xlu0 %v268, 127
      %v273 = vpop.permute.xlu0 %272
      %274 = vrot.lane.b32.xlu0 %v269, 127
      %v275 = vpop.permute.xlu0 %274
      %vm276 = vcmask 1039360
      %v277 = vsel %vm276, %v273, %v275
      %279 = vrot.lane.b32.xlu0 %v268, 126
      %v280 = vpop.permute.xlu0 %279
      %281 = vrot.lane.b32.xlu0 %v269, 126
      %v282 = vpop.permute.xlu0 %281
      %vm283 = vcmask 1031168
      %v284 = vsel %vm283, %v280, %v282
      %286 = vrot.lane.b32.xlu0 %v268, 112
      %v287 = vpop.permute.xlu0 %286
      %288 = vrot.lane.b32.xlu0 %v269, 112
      %v289 = vpop.permute.xlu0 %288
      %vm290 = vcmask 916480
      %v291 = vsel %vm290, %v287, %v289
      %293 = vrot.lane.b32.xlu0 %v268, 111
      %v294 = vpop.permute.xlu0 %293
      %295 = vrot.lane.b32.xlu0 %v269, 111
      %v296 = vpop.permute.xlu0 %295
      %vm297 = vcmask 908288
      %v298 = vsel %vm297, %v294, %v296
      %300 = vrot.lane.b32.xlu0 %v268, 110
      %v301 = vpop.permute.xlu0 %300
      %302 = vrot.lane.b32.xlu0 %v269, 110
      %v303 = vpop.permute.xlu0 %302
      %vm304 = vcmask 900096
      %v305 = vsel %vm304, %v301, %v303
      %307 = vrot.lane.b32.xlu0 %v268, 96
      %v308 = vpop.permute.xlu0 %307
      %309 = vrot.lane.b32.xlu0 %v269, 96
      %v310 = vpop.permute.xlu0 %309
      %vm311 = vcmask 785408
      %v312 = vsel %vm311, %v308, %v310
      %314 = vrot.lane.b32.xlu0 %v268, 95
      %v315 = vpop.permute.xlu0 %314
      %316 = vrot.lane.b32.xlu0 %v269, 95
      %v317 = vpop.permute.xlu0 %316
      %vm318 = vcmask 777216
      %v319 = vsel %vm318, %v315, %v317
      %321 = vrot.lane.b32.xlu0 %v268, 94
      %v322 = vpop.permute.xlu0 %321
      %323 = vrot.lane.b32.xlu0 %v269, 94
      %v324 = vpop.permute.xlu0 %323
      %vm325 = vcmask 769024
      %v326 = vsel %vm325, %v322, %v324
      %v328 = vpack.c.bf16 %v277, %v268
      %v329 = vpack.c.bf16 %v291, %v284
      %v330 = vpack.c.bf16 %v305, %v298
      %v331 = vpack.c.bf16 %v319, %v312
      %v332 = vpack.c.bf16 %v326, %v326
      %v333 = vld [vmem:[%s2] sm:$0xf]
      %v334 = vld [vmem:[%s3] sm:$0xff]
      %336 = vset.pattern.permute.xlu0 0
      %337 = vperm.xlu0 %336, %v334
      %v338 = vpop.permute.xlu0 %337
      %vm340 = vcmask 588800
      %v342 = vsel %vm340, %v333, 0
      %vm344 = vcmask 1043456
      %v346 = vsel %vm344, %v332, 0
      %348 = vmatprep.subr.bf16.mxu0 0
      %349 = vmatpush1.bf16.msra.mxu0 0
      %350 = vmatprep.subr.bf16.mxu0 0
      %351 = vmatpush1.bf16.msra.mxu0 0
      %352 = vmatprep.subr.bf16.mxu0 0
      %353 = vmatpush1.bf16.msra.mxu0 0
      %354 = vmatprep.subr.bf16.mxu0 0
      %355 = vmatpush1.bf16.msra.mxu0 %v346
      %356 = vmatprep.subr.bf16.mxu0 0
      %357 = vmatpush1.bf16.msra.mxu0 %v331
      %358 = vmatprep.subr.bf16.mxu0 0
      %359 = vmatpush1.bf16.msra.mxu0 %v330
      %360 = vmatprep.subr.bf16.mxu0 0
      %361 = vmatpush1.bf16.msra.mxu0 %v329
      %362 = vmatprep.subr.bf16.mxu0 0
      %363 = vmatpush1.bf16.msra.mxu0 %v328
      %364 = vmatprep.subr.bf16.mxu0 0
      %365 = vmatpush2.bf16.msra.mxu0 0
      %366 = vmatprep.subr.bf16.mxu0 0
      %367 = vmatpush2.bf16.msra.mxu0 0
      %368 = vmatprep.subr.bf16.mxu0 0
      %369 = vmatpush2.bf16.msra.mxu0 0
      %370 = vmatprep.subr.bf16.mxu0 0
      %371 = vmatpush2.bf16.msra.mxu0 0
      %372 = vmatprep.subr.bf16.mxu0 0
      %373 = vmatpush2.bf16.msra.mxu0 0
      %374 = vmatprep.subr.bf16.mxu0 0
      %375 = vmatpush2.bf16.msra.mxu0 0
      %376 = vmatprep.subr.bf16.mxu0 0
      %377 = vmatpush2.bf16.msra.mxu0 0
      %378 = vmatprep.subr.bf16.mxu0 0
      %379 = vmatpush2.bf16.msra.mxu0 0
      %380 = vmatprep.mubr.bf16.mxu0 0
      %381 = vmatmul.mubr.bf16.gmra.mxu0 %v342
      %v382 = vpop.f32.mrf.mxu0
      %v383 = vadd.f32 %v338, %v382
      %v384 = vpop.f32.mrf.mxu0
      %v385 = vpop.f32.mrf.mxu0
      %v386 = vpop.f32.mrf.mxu0
      %387 = vdwg.mxu0
      %v388 = vmax.f32 %v383, 0.0
      %389 = vset.pattern.permute.xlu0 1
      %390 = vperm.xlu0 %389, %v334
      %v391 = vpop.permute.xlu0 %390
      %v393 = vmul.f32 %v388, %v391
      %394 = vset.pattern.permute.xlu0 2
      %395 = vperm.xlu0 %394, %v334
      %v396 = vpop.permute.xlu0 %395
      %v398 = vadd.f32 %v393, %v396
      %399 = vst [vmem:[%s266] sm:$0xff] %v398
      %p400 = scmp.lt.s32.totalorder %s19, 1
      %s401 = scalar_select %p400, %s19, 1
      %p402 = scmp.lt.s32.totalorder %s20, 1
      %s403 = scalar_select %p402, %s20, 1
      %s404 = smul.addr %s401, 2
      %s405 = sadd.s32 %s403, %s404
      %s406 = smul.addr %s405, 8
      %s407 = scalar_lea.vmem %s4, %s406
      // Predicated region
      $region37: #{sepconv_forward.1} parent=35 // pred_check
        %p408 = pneg %p147
      $region38: #{sepconv_forward.1} parent=35 // pred_check_branch
        %410 = sbr.rel (%p408) target = $region40
      $region39: #{sepconv_forward.1} parent=35 // pred_region
        _
      $region40: #{sepconv_forward.1} parent=35 // pred_fallthru
        _
    $region36: #{sepconv_forward.1} parent=5 // pred_fallthru
      _
    %p411 = scmp.le.s32.totalorder 2, %s10
    // Predicated region
    $region41: #{sepconv_forward.1} parent=5 // pred_check
      %p412 = pneg %p411
    $region42: #{sepconv_forward.1} parent=5 // pred_check_branch
      %414 = sbr.rel (%p412) target = $region44
    $region43: #{sepconv_forward.1} parent=5 // pred_region
      %s415 = ssub.s32 %s10, 2
      // Predicated region
      $region45: #{sepconv_forward.1} parent=43 // pred_check
        %p416 = pneg %p153
      $region46: #{sepconv_forward.1} parent=43 // pred_check_branch
        %418 = sbr.rel (%p416) target = $region48
      $region47: #{sepconv_forward.1} parent=43 // pred_region
        %p419 = scmp.lt.s32.totalorder %s21, 1
        %s420 = scalar_select %p419, %s21, 1
        %p421 = scmp.lt.s32.totalorder %s22, 1
        %s422 = scalar_select %p421, %s22, 1
        %s423 = smul.addr %s420, 2
        %s424 = sadd.s32 %s422, %s423
        %s425 = smul.addr %s424, 8
        %s426 = scalar_lea.vmem %s4, %s425
      $region48: #{sepconv_forward.1} parent=43 // pred_fallthru
        _
    $region44: #{sepconv_forward.1} parent=5 // pred_fallthru
      _
  $region6: #{sepconv_forward.1} parent=0 // loop_footer
    %s14 = sadd.s32 1, %s10
  $region7: #{sepconv_forward.1} parent=0 // loop_footer_branch
    %9 = sbr.rel target = $region3
  $region8: #{sepconv_forward.1} parent=0 // loop_exit
    _

</llo_original>
